<compile_context>
chip_gen: v5e
topology: v5e:2x2
jax: 0.10.0
libtpu: 0.0.40
codegen_flags: <defaults>
</compile_context>

<pallas_src>
import functools

import jax
import jax.numpy as jnp
from jax.experimental import pallas as pl
from jax.experimental.pallas import tpu as pltpu


def _round_up(x, m):
    return ((x + m - 1) // m) * m


# ---------------------------------------------------------------------------
# Kernels: 3 MXU dots + 2 ReLUs + 3 broadcast bias adds, all on f32 accum.
# ---------------------------------------------------------------------------
def _mlp_kernel(x_ref, w1_ref, w2_ref, w3_ref, b1_ref, b2_ref, b3_ref, q_ref):
    cdt = w1_ref.dtype
    x = x_ref[...].astype(cdt)                       # in-kernel cast (VPU, cheap)
    h = jnp.dot(x, w1_ref[...], preferred_element_type=jnp.float32) + b1_ref[...]
    h = jnp.maximum(h, 0.0).astype(cdt)
    h = jnp.dot(h, w2_ref[...], preferred_element_type=jnp.float32) + b2_ref[...]
    h = jnp.maximum(h, 0.0).astype(cdt)
    q = jnp.dot(h, w3_ref[...], preferred_element_type=jnp.float32) + b3_ref[...]
    q_ref[...] = q.astype(q_ref.dtype)


def _mlp_kernel_split(x_ref, z_ref, w1a_ref, w1b_ref, w2_ref, w3_ref,
                      b1_ref, b2_ref, b3_ref, q_ref):
    # fc1(concat(x, z)) == x @ w1[:F] + z @ w1[F:]  -> no wrapper concatenate.
    cdt = w1a_ref.dtype
    x = x_ref[...].astype(cdt)
    z = z_ref[...].astype(cdt)
    h = (jnp.dot(x, w1a_ref[...], preferred_element_type=jnp.float32)
         + jnp.dot(z, w1b_ref[...], preferred_element_type=jnp.float32)
         + b1_ref[...])
    h = jnp.maximum(h, 0.0).astype(cdt)
    h = jnp.dot(h, w2_ref[...], preferred_element_type=jnp.float32) + b2_ref[...]
    h = jnp.maximum(h, 0.0).astype(cdt)
    q = jnp.dot(h, w3_ref[...], preferred_element_type=jnp.float32) + b3_ref[...]
    q_ref[...] = q.astype(q_ref.dtype)


# ---------------------------------------------------------------------------
# One-time parameter preparation (do NOT call per forward step).
# ---------------------------------------------------------------------------
def prepare_params(params, *, split=None, compute_dtype=jnp.bfloat16):
    """Cast weights to the MXU compute dtype (bf16 recommended on all TPU gens;
    accumulation stays f32), keep biases f32, and optionally split w1's rows at
    `split` (= inputs.shape[-1]) so the kernel can consume (inputs, proxy_z)
    directly without a per-call concatenate.

    params: dict with w1 [F,H], b1 [1,H], w2 [H,H], b2 [1,H], w3 [H,A], b3 [1,A]
            (weights stored [in_features, out_features], i.e. transposed from
             PyTorch nn.Linear).
    """
    cdt = jnp.dtype(compute_dtype)
    w1 = jnp.asarray(params["w1"], cdt)
    out = {
        "w2": jnp.asarray(params["w2"], cdt),
        "w3": jnp.asarray(params["w3"], cdt),
        "b1": jnp.asarray(params["b1"], jnp.float32).reshape(1, -1),
        "b2": jnp.asarray(params["b2"], jnp.float32).reshape(1, -1),
        "b3": jnp.asarray(params["b3"], jnp.float32).reshape(1, -1),
    }
    if split is None:
        out["w1"] = w1
    else:
        out["w1a"] = w1[:split]
        out["w1b"] = w1[split:]
    return out


# ---------------------------------------------------------------------------
# Forward pass.
# ---------------------------------------------------------------------------
@functools.partial(jax.jit, static_argnames=("block_b",))
def mlp_agent_forward(inputs, params, proxy_z=None, *, block_b=None):
    """Pallas implementation of MLPAgent.forward.

    inputs : [..., in_dim]        (any float dtype; read once, cast in-kernel)
    proxy_z: optional [..., z_dim] (requires params prepared with split=in_dim)
    params : output of prepare_params(...)
    returns: [..., n_actions] in the input dtype.
    """
    lead = inputs.shape[:-1]
    Fx = inputs.shape[-1]
    x2d = inputs.reshape(-1, Fx)
    B = x2d.shape[0]
    out_dtype = inputs.dtype

    split = "w1a" in params
    if proxy_z is not None:
        assert split, "prepare_params(..., split=inputs.shape[-1]) required for proxy_z"
        assert inputs.shape[:-1] == proxy_z.shape[:-1], (inputs.shape, proxy_z.shape)
        z2d = proxy_z.reshape(B, -1)
        Fz = z2d.shape[-1]
    else:
        assert not split, "params were prepared with a split but no proxy_z was given"
        Fz = 0

    w1 = params["w1a"] if split else params["w1"]
    H = w1.shape[1]
    A = params["w3"].shape[1]

    # ---- batch tile selection -------------------------------------------
    if block_b is None:
        if B <= 128:
            block_b = B                                   # full-extent block
        else:
            # >=2 "parallel" grid steps (v7x has 2 TCs), cap at 2048 rows.
            block_b = min(2048, _round_up(pl.cdiv(B, 2), 128))
    else:
        block_b = max(8, _round_up(block_b, 8))           # sublane-legal
    grid = (pl.cdiv(B, block_b),)

    # ---- cost estimate from true (unpadded) dims -------------------------
    in_itemsize = jnp.dtype(inputs.dtype).itemsize
    w_itemsize = jnp.dtype(w1.dtype).itemsize
    w_items = w1.size + (params["w1b"].size if split else 0) \
        + params["w2"].size + params["w3"].size
    b_items = 2 * H + A
    flops = 2 * B * ((Fx + Fz) * H + H * H + H * A)
    bytes_accessed = (B * (Fx + Fz) * in_itemsize
                      + w_items * w_itemsize
                      + b_items * 4
                      + B * A * jnp.dtype(out_dtype).itemsize)

    # ---- block specs ------------------------------------------------------
    def const_spec(arr):
        return pl.BlockSpec(arr.shape, lambda i: (0, 0))   # resident in VMEM

    x_spec = pl.BlockSpec((block_b, Fx), lambda i: (i, 0))
    out_spec = pl.BlockSpec((block_b, A), lambda i: (i, 0))

    if split:
        kernel = _mlp_kernel_split
        operands = (x2d, z2d, params["w1a"], params["w1b"], params["w2"],
                    params["w3"], params["b1"], params["b2"], params["b3"])
        in_specs = [x_spec,
                    pl.BlockSpec((block_b, Fz), lambda i: (i, 0)),
                    const_spec(params["w1a"]), const_spec(params["w1b"]),
                    const_spec(params["w2"]), const_spec(params["w3"]),
                    const_spec(params["b1"]), const_spec(params["b2"]),
                    const_spec(params["b3"])]
    else:
        kernel = _mlp_kernel
        operands = (x2d, params["w1"], params["w2"], params["w3"],
                    params["b1"], params["b2"], params["b3"])
        in_specs = [x_spec,
                    const_spec(params["w1"]), const_spec(params["w2"]),
                    const_spec(params["w3"]),
                    const_spec(params["b1"]), const_spec(params["b2"]),
                    const_spec(params["b3"])]

    q = pl.pallas_call(
        kernel,
        out_shape=jax.ShapeDtypeStruct((B, A), out_dtype),
        grid_spec=pltpu.PrefetchScalarGridSpec(
            num_scalar_prefetch=0,
            grid=grid,
            in_specs=in_specs,
            out_specs=out_spec,
        ),
        compiler_params=pltpu.CompilerParams(
            dimension_semantics=("parallel",),
        ),
        cost_estimate=pl.CostEstimate(
            flops=flops, transcendentals=0, bytes_accessed=bytes_accessed
        ),
    )(*operands)

    return q.reshape(*lead, A)


# ---------------------------------------------------------------------------
# Init matching nn.Linear's U(-1/sqrt(fan_in), +1/sqrt(fan_in)).
# ---------------------------------------------------------------------------
def init_params(key, in_dim, hidden_dim, n_actions, dtype=jnp.float32):
    ks = jax.random.split(key, 6)

    def lin(kw, kb, fan_in, fan_out):
        bound = 1.0 / jnp.sqrt(fan_in)
        w = jax.random.uniform(kw, (fan_in, fan_out), dtype, -bound, bound)
        b = jax.random.uniform(kb, (1, fan_out), dtype, -bound, bound)
        return w, b

    w1, b1 = lin(ks[0], ks[1], in_dim, hidden_dim)
    w2, b2 = lin(ks[2], ks[3], hidden_dim, hidden_dim)
    w3, b3 = lin(ks[4], ks[5], hidden_dim, n_actions)
    return {"w1": w1, "b1": b1, "w2": w2, "b2": b2, "w3": w3, "b3": b3}


def _reference(inputs, params, proxy_z=None):
    x = inputs if proxy_z is None else jnp.concatenate((inputs, proxy_z), axis=-1)
    h1 = jnp.maximum(x @ params["w1"] + params["b1"], 0.0)
    h2 = jnp.maximum(h1 @ params["w2"] + params["b2"], 0.0)
    return h2 @ params["w3"] + params["b3"]


if __name__ == "__main__":
    # Shapes consistent with MLPAgent: obs dim 16, proxy_z dim 8, hidden 32,
    # n_actions 5, batch (bs * n_agents) = 64.
    key = jax.random.PRNGKey(0)
    k_in, k_z, k_p, k_big = jax.random.split(key, 4)

    batch, obs_dim, z_dim, hidden_dim, n_actions = 64, 16, 8, 32, 5

    inputs = jax.random.normal(k_in, (batch, obs_dim), dtype=jnp.float32)
    proxy_z = jax.random.normal(k_z, (batch, z_dim), dtype=jnp.float32)
    raw = init_params(k_p, obs_dim + z_dim, hidden_dim, n_actions)
    q_ref = _reference(inputs, raw, proxy_z)

    # f32 compute path (exact check).
    p_f32 = prepare_params(raw, split=obs_dim, compute_dtype=jnp.float32)
    q = jax.block_until_ready(mlp_agent_forward(inputs, p_f32, proxy_z))
    assert q.shape == (batch, n_actions)
    assert jnp.allclose(q, q_ref, atol=1e-4, rtol=1e-4)

    # bf16 compute path (default; f32 accumulation, f32 output).
    p_bf16 = prepare_params(raw, split=obs_dim)
    q_bf16 = jax.block_until_ready(mlp_agent_forward(inputs, p_bf16, proxy_z))
    assert q_bf16.dtype == jnp.float32
    assert jnp.allclose(q_bf16, q_ref, atol=1e-1, rtol=1e-1)

    # proxy_z=None branch (fc1 takes raw obs dim).
    raw2 = init_params(k_p, obs_dim, hidden_dim, n_actions)
    p2_f32 = prepare_params(raw2, compute_dtype=jnp.float32)
    q2 = jax.block_until_ready(mlp_agent_forward(inputs, p2_f32))
    assert jnp.allclose(q2, _reference(inputs, raw2), atol=1e-4, rtol=1e-4)

    # Larger batch: grid > 1 ("parallel" -> shards across v7x TCs) with a
    # partial last tile (masked output writes).
    big_b = 300
    big_x = jax.random.normal(k_big, (big_b, obs_dim), dtype=jnp.float32)
    big_z = jax.random.normal(k_z, (big_b, z_dim), dtype=jnp.float32)
    q_big = jax.block_until_ready(mlp_agent_forward(big_x, p_bf16, big_z))
    assert q_big.shape == (big_b, n_actions)
    assert jnp.allclose(q_big, _reference(big_x, raw, big_z), atol=1e-1, rtol=1e-1)

    print("KERNEL_OK")
</pallas_src>

<mosaic_0001>
module attributes {stable_mosaic.version = 11 : i64} {
  func.func @_mlp_kernel_split(%arg0: i32, %arg1: memref<64x16xf32, #tpu.memory_space<vmem>>, %arg2: memref<64x8xf32, #tpu.memory_space<vmem>>, %arg3: memref<16x32xf32, #tpu.memory_space<vmem>>, %arg4: memref<8x32xf32, #tpu.memory_space<vmem>>, %arg5: memref<32x32xf32, #tpu.memory_space<vmem>>, %arg6: memref<32x5xf32, #tpu.memory_space<vmem>>, %arg7: memref<1x32xf32, #tpu.memory_space<vmem>>, %arg8: memref<1x32xf32, #tpu.memory_space<vmem>>, %arg9: memref<1x5xf32, #tpu.memory_space<vmem>>, %arg10: memref<64x5xf32, #tpu.memory_space<vmem>>) attributes {dimension_semantics = [#tpu.dimension_semantics<parallel>], iteration_bounds = array<i64: 1>, scalar_prefetch = 0 : i64, scratch_operands = 0 : i64, tpu.core_type = #tpu.core_type<tc>, window_params = [{transform_indices = @transform_0, window_bounds = array<i64: 64, 16>}, {transform_indices = @transform_1, window_bounds = array<i64: 64, 8>}, {pipeline_mode = #tpu.pipeline_mode<synchronous>, transform_indices = @transform_2, window_bounds = array<i64: 16, 32>}, {pipeline_mode = #tpu.pipeline_mode<synchronous>, transform_indices = @transform_3, window_bounds = array<i64: 8, 32>}, {pipeline_mode = #tpu.pipeline_mode<synchronous>, transform_indices = @transform_4, window_bounds = array<i64: 32, 32>}, {pipeline_mode = #tpu.pipeline_mode<synchronous>, transform_indices = @transform_5, window_bounds = array<i64: 32, 5>}, {pipeline_mode = #tpu.pipeline_mode<synchronous>, transform_indices = @transform_6, window_bounds = array<i64: 1, 32>}, {pipeline_mode = #tpu.pipeline_mode<synchronous>, transform_indices = @transform_7, window_bounds = array<i64: 1, 32>}, {pipeline_mode = #tpu.pipeline_mode<synchronous>, transform_indices = @transform_8, window_bounds = array<i64: 1, 5>}, {transform_indices = @transform_9, window_bounds = array<i64: 64, 5>}]} {
    %c0 = arith.constant 0 : index
    %c0_0 = arith.constant 0 : index
    %0 = vector.load %arg1[%c0, %c0_0] : memref<64x16xf32, #tpu.memory_space<vmem>>, vector<64x16xf32>
    %c0_1 = arith.constant 0 : index
    %c0_2 = arith.constant 0 : index
    %1 = vector.load %arg2[%c0_1, %c0_2] : memref<64x8xf32, #tpu.memory_space<vmem>>, vector<64x8xf32>
    %c0_3 = arith.constant 0 : index
    %c0_4 = arith.constant 0 : index
    %2 = vector.load %arg3[%c0_3, %c0_4] : memref<16x32xf32, #tpu.memory_space<vmem>>, vector<16x32xf32>
    %cst = arith.constant dense<0.000000e+00> : vector<64x32xf32>
    %3 = tpu.matmul %0, %2, %cst {dimension_numbers = #tpu.dot_dimension_numbers<[1], [0], [0], [1], [0, 0, 1, 1], [], []>} : vector<64x16xf32>, vector<16x32xf32>, vector<64x32xf32> -> vector<64x32xf32>
    %c0_5 = arith.constant 0 : index
    %c0_6 = arith.constant 0 : index
    %4 = vector.load %arg4[%c0_5, %c0_6] : memref<8x32xf32, #tpu.memory_space<vmem>>, vector<8x32xf32>
    %cst_7 = arith.constant dense<0.000000e+00> : vector<64x32xf32>
    %5 = tpu.matmul %1, %4, %cst_7 {dimension_numbers = #tpu.dot_dimension_numbers<[1], [0], [0], [1], [0, 0, 1, 1], [], []>} : vector<64x8xf32>, vector<8x32xf32>, vector<64x32xf32> -> vector<64x32xf32>
    %6 = arith.addf %3, %5 : vector<64x32xf32>
    %c0_8 = arith.constant 0 : index
    %c0_9 = arith.constant 0 : index
    %7 = vector.load %arg7[%c0_8, %c0_9] : memref<1x32xf32, #tpu.memory_space<vmem>>, vector<1x32xf32>
    %8 = vector.broadcast %7 : vector<1x32xf32> to vector<64x32xf32>
    %9 = arith.addf %6, %8 : vector<64x32xf32>
    %cst_10 = arith.constant 0.000000e+00 : f32
    %10 = vector.broadcast %cst_10 : f32 to vector<64x32xf32>
    %11 = arith.maximumf %9, %10 : vector<64x32xf32>
    %c0_11 = arith.constant 0 : index
    %c0_12 = arith.constant 0 : index
    %12 = vector.load %arg5[%c0_11, %c0_12] : memref<32x32xf32, #tpu.memory_space<vmem>>, vector<32x32xf32>
    %cst_13 = arith.constant dense<0.000000e+00> : vector<64x32xf32>
    %13 = tpu.matmul %11, %12, %cst_13 {dimension_numbers = #tpu.dot_dimension_numbers<[1], [0], [0], [1], [0, 0, 1, 1], [], []>} : vector<64x32xf32>, vector<32x32xf32>, vector<64x32xf32> -> vector<64x32xf32>
    %c0_14 = arith.constant 0 : index
    %c0_15 = arith.constant 0 : index
    %14 = vector.load %arg8[%c0_14, %c0_15] : memref<1x32xf32, #tpu.memory_space<vmem>>, vector<1x32xf32>
    %15 = vector.broadcast %14 : vector<1x32xf32> to vector<64x32xf32>
    %16 = arith.addf %13, %15 : vector<64x32xf32>
    %cst_16 = arith.constant 0.000000e+00 : f32
    %17 = vector.broadcast %cst_16 : f32 to vector<64x32xf32>
    %18 = arith.maximumf %16, %17 : vector<64x32xf32>
    %c0_17 = arith.constant 0 : index
    %c0_18 = arith.constant 0 : index
    %19 = vector.load %arg6[%c0_17, %c0_18] : memref<32x5xf32, #tpu.memory_space<vmem>>, vector<32x5xf32>
    %cst_19 = arith.constant dense<0.000000e+00> : vector<64x5xf32>
    %20 = tpu.matmul %18, %19, %cst_19 {dimension_numbers = #tpu.dot_dimension_numbers<[1], [0], [0], [1], [0, 0, 1, 1], [], []>} : vector<64x32xf32>, vector<32x5xf32>, vector<64x5xf32> -> vector<64x5xf32>
    %c0_20 = arith.constant 0 : index
    %c0_21 = arith.constant 0 : index
    %21 = vector.load %arg9[%c0_20, %c0_21] : memref<1x5xf32, #tpu.memory_space<vmem>>, vector<1x5xf32>
    %22 = vector.broadcast %21 : vector<1x5xf32> to vector<64x5xf32>
    %23 = arith.addf %20, %22 : vector<64x5xf32>
    %c0_22 = arith.constant 0 : index
    %c0_23 = arith.constant 0 : index
    %24 = vector.load %arg10[%c0_22, %c0_23] : memref<64x5xf32, #tpu.memory_space<vmem>>, vector<64x5xf32>
    tpu.vector_store %arg10[%c0_22, %c0_23], %23 {strides = array<i32>} : memref<64x5xf32, #tpu.memory_space<vmem>>, vector<64x5xf32>,
    return
  }
  func.func @transform_0(%arg0: i32) -> (i32, i32) {
    %c0_i32 = arith.constant 0 : i32
    %c0_i32_0 = arith.constant 0 : i32
    return %arg0, %c0_i32 : i32, i32
  }
  func.func @transform_1(%arg0: i32) -> (i32, i32) {
    %c0_i32 = arith.constant 0 : i32
    %c0_i32_0 = arith.constant 0 : i32
    return %arg0, %c0_i32 : i32, i32
  }
  func.func @transform_2(%arg0: i32) -> (i32, i32) {
    %c0_i32 = arith.constant 0 : i32
    %c0_i32_0 = arith.constant 0 : i32
    %c0_i32_1 = arith.constant 0 : i32
    return %c0_i32, %c0_i32_0 : i32, i32
  }
  func.func @transform_3(%arg0: i32) -> (i32, i32) {
    %c0_i32 = arith.constant 0 : i32
    %c0_i32_0 = arith.constant 0 : i32
    %c0_i32_1 = arith.constant 0 : i32
    return %c0_i32, %c0_i32_0 : i32, i32
  }
  func.func @transform_4(%arg0: i32) -> (i32, i32) {
    %c0_i32 = arith.constant 0 : i32
    %c0_i32_0 = arith.constant 0 : i32
    %c0_i32_1 = arith.constant 0 : i32
    return %c0_i32, %c0_i32_0 : i32, i32
  }
  func.func @transform_5(%arg0: i32) -> (i32, i32) {
    %c0_i32 = arith.constant 0 : i32
    %c0_i32_0 = arith.constant 0 : i32
    %c0_i32_1 = arith.constant 0 : i32
    return %c0_i32, %c0_i32_0 : i32, i32
  }
  func.func @transform_6(%arg0: i32) -> (i32, i32) {
    %c0_i32 = arith.constant 0 : i32
    %c0_i32_0 = arith.constant 0 : i32
    %c0_i32_1 = arith.constant 0 : i32
    return %c0_i32, %c0_i32_0 : i32, i32
  }
  func.func @transform_7(%arg0: i32) -> (i32, i32) {
    %c0_i32 = arith.constant 0 : i32
    %c0_i32_0 = arith.constant 0 : i32
    %c0_i32_1 = arith.constant 0 : i32
    return %c0_i32, %c0_i32_0 : i32, i32
  }
  func.func @transform_8(%arg0: i32) -> (i32, i32) {
    %c0_i32 = arith.constant 0 : i32
    %c0_i32_0 = arith.constant 0 : i32
    %c0_i32_1 = arith.constant 0 : i32
    return %c0_i32, %c0_i32_0 : i32, i32
  }
  func.func @transform_9(%arg0: i32) -> (i32, i32) {
    %c0_i32 = arith.constant 0 : i32
    %c0_i32_0 = arith.constant 0 : i32
    return %arg0, %c0_i32 : i32, i32
  }
}

</mosaic_0001>

<llo_original>
// kernel: mlp_agent_forward.1
$region0: #{mlp_agent_forward.1}
  #allocation0 [shape = 'u32[]', space=smem, size = 0x4, offset = 0x4, fixed_abs, tag = 'smem constant byte address 0x4 - core index']
  #allocation1 [shape = 'u32[72,128]{1,0:T(1,128)}', space=vmem, size = 0x9000, scoped, tag = 'internal scratch']
  %s0 = inlined_call_operand.vmem [shape: f32[64,16], index: 0, kind: input, shape index: {}]
  %s1 = inlined_call_operand.vmem [shape: f32[64,8], index: 1, kind: input, shape index: {}]
  %s2 = inlined_call_operand.vmem [shape: f32[16,32], index: 2, kind: input, shape index: {}]
  %s3 = inlined_call_operand.vmem [shape: f32[8,32], index: 3, kind: input, shape index: {}]
  %s4 = inlined_call_operand.vmem [shape: f32[32,32], index: 4, kind: input, shape index: {}]
  %s5 = inlined_call_operand.vmem [shape: f32[32,5], index: 5, kind: input, shape index: {}]
  %s6 = inlined_call_operand.vmem [shape: f32[1,32], index: 6, kind: input, shape index: {}]
  %s7 = inlined_call_operand.vmem [shape: f32[1,32], index: 7, kind: input, shape index: {}]
  %s8 = inlined_call_operand.vmem [shape: f32[1,5], index: 8, kind: input, shape index: {}]
  %s9 = inlined_call_operand.vmem [shape: f32[64,5], index: 9, kind: output, shape index: {}]
  %s10 = sld [smem:[#allocation0]]
  $region46: #{mlp_agent_forward.1} parent=0
    _
  %s12 = ssub.s32 1, %s10
  %s13 = scalar_select 0, %s12, %s10
  // Predicated region
  $region2: #{mlp_agent_forward.1} parent=0 // pred_check
    _
  $region3: #{mlp_agent_forward.1} parent=0 // pred_check_branch
    %15 = sbr.rel (0) target = $region5
  $region4: #{mlp_agent_forward.1} parent=0 // pred_region
    _
  $region5: #{mlp_agent_forward.1} parent=0 // pred_fallthru
    _
  // Predicated region
  $region6: #{mlp_agent_forward.1} parent=0 // pred_check
    _
  $region7: #{mlp_agent_forward.1} parent=0 // pred_check_branch
    %17 = sbr.rel (0) target = $region9
  $region8: #{mlp_agent_forward.1} parent=0 // pred_region
    _
  $region9: #{mlp_agent_forward.1} parent=0 // pred_fallthru
    _
  // Predicated region
  $region10: #{mlp_agent_forward.1} parent=0 // pred_check
    _
  $region11: #{mlp_agent_forward.1} parent=0 // pred_check_branch
    %19 = sbr.rel (0) target = $region13
  $region12: #{mlp_agent_forward.1} parent=0 // pred_region
    _
  $region13: #{mlp_agent_forward.1} parent=0 // pred_fallthru
    _
  // Predicated region
  $region14: #{mlp_agent_forward.1} parent=0 // pred_check
    _
  $region15: #{mlp_agent_forward.1} parent=0 // pred_check_branch
    %21 = sbr.rel (0) target = $region17
  $region16: #{mlp_agent_forward.1} parent=0 // pred_region
    _
  $region17: #{mlp_agent_forward.1} parent=0 // pred_fallthru
    _
  // Predicated region
  $region18: #{mlp_agent_forward.1} parent=0 // pred_check
    _
  $region19: #{mlp_agent_forward.1} parent=0 // pred_check_branch
    %23 = sbr.rel (0) target = $region21
  $region20: #{mlp_agent_forward.1} parent=0 // pred_region
    _
  $region21: #{mlp_agent_forward.1} parent=0 // pred_fallthru
    _
  // Predicated region
  $region22: #{mlp_agent_forward.1} parent=0 // pred_check
    _
  $region23: #{mlp_agent_forward.1} parent=0 // pred_check_branch
    %25 = sbr.rel (0) target = $region25
  $region24: #{mlp_agent_forward.1} parent=0 // pred_region
    _
  $region25: #{mlp_agent_forward.1} parent=0 // pred_fallthru
    _
  // Predicated region
  $region26: #{mlp_agent_forward.1} parent=0 // pred_check
    _
  $region27: #{mlp_agent_forward.1} parent=0 // pred_check_branch
    %27 = sbr.rel (0) target = $region29
  $region28: #{mlp_agent_forward.1} parent=0 // pred_region
    _
  $region29: #{mlp_agent_forward.1} parent=0 // pred_fallthru
    _
  // Predicated region
  $region30: #{mlp_agent_forward.1} parent=0 // pred_check
    _
  $region31: #{mlp_agent_forward.1} parent=0 // pred_check_branch
    %29 = sbr.rel (0) target = $region33
  $region32: #{mlp_agent_forward.1} parent=0 // pred_region
    _
  $region33: #{mlp_agent_forward.1} parent=0 // pred_fallthru
    _
  // Predicated region
  $region34: #{mlp_agent_forward.1} parent=0 // pred_check
    _
  $region35: #{mlp_agent_forward.1} parent=0 // pred_check_branch
    %31 = sbr.rel (0) target = $region37
  $region36: #{mlp_agent_forward.1} parent=0 // pred_region
    _
  $region37: #{mlp_agent_forward.1} parent=0 // pred_fallthru
    _
  %v32 = vld [vmem:[%s0] sm:$0xff]
  %v33 = vld [vmem:[%s0 + $0x8] sm:$0xff]
  %v34 = vld [vmem:[%s0 + $0x10] sm:$0xff]
  %v35 = vld [vmem:[%s0 + $0x18] sm:$0xff]
  %v36 = vld [vmem:[%s0 + $0x20] sm:$0xff]
  %v37 = vld [vmem:[%s0 + $0x28] sm:$0xff]
  %v38 = vld [vmem:[%s0 + $0x30] sm:$0xff]
  %v39 = vld [vmem:[%s0 + $0x38] sm:$0xff]
  %v40 = vld [vmem:[%s1] sm:$0xff]
  %v41 = vld [vmem:[%s1 + $0x8] sm:$0xff]
  %v42 = vld [vmem:[%s1 + $0x10] sm:$0xff]
  %v43 = vld [vmem:[%s1 + $0x18] sm:$0xff]
  %v44 = vld [vmem:[%s1 + $0x20] sm:$0xff]
  %v45 = vld [vmem:[%s1 + $0x28] sm:$0xff]
  %v46 = vld [vmem:[%s1 + $0x30] sm:$0xff]
  %v47 = vld [vmem:[%s1 + $0x38] sm:$0xff]
  %v48 = vld [vmem:[%s2] sm:$0xff]
  %v49 = vld [vmem:[%s2 + $0x8] sm:$0xff]
  %v50 = vld [vmem:[%s3] sm:$0xff]
  %vm51 = vcmask 64512
  %v53 = vsel %vm51, %v40, 0
  %v56 = vsel %vm51, %v41, 0
  %v59 = vsel %vm51, %v42, 0
  %v62 = vsel %vm51, %v43, 0
  %v65 = vsel %vm51, %v44, 0
  %v68 = vsel %vm51, %v45, 0
  %v71 = vsel %vm51, %v46, 0
  %v74 = vsel %vm51, %v47, 0
  %76 = vmatpush.msra.mxu0 0.0
  %77 = vmatpush.msra.mxu0 0.0
  %78 = vmatpush.msra.mxu0 0.0
  %79 = vmatpush.msra.mxu0 0.0
  %80 = vmatpush.msra.mxu0 0.0
  %81 = vmatpush.msra.mxu0 0.0
  %82 = vmatpush.msra.mxu0 0.0
  %83 = vmatpush.msra.mxu0 0.0
  %84 = vmatpush.msra.mxu0 0.0
  %85 = vmatpush.msra.mxu0 0.0
  %86 = vmatpush.msra.mxu0 0.0
  %87 = vmatpush.msra.mxu0 0.0
  %88 = vmatpush.msra.mxu0 0.0
  %89 = vmatpush.msra.mxu0 0.0
  %90 = vmatpush.msra.mxu0 0.0
  %91 = vmatpush.msra.mxu0 %v50
  %92 = vmatmul.f32.gmra.mxu0 %v53
  %v93 = vpop.f32.mrf.mxu0
  %v94 = vadd.f32 0.0, %v93
  %95 = vmatmul.f32.gmra.mxu0 %v56
  %v96 = vpop.f32.mrf.mxu0
  %v97 = vadd.f32 0.0, %v96
  %98 = vmatmul.f32.gmra.mxu0 %v59
  %v99 = vpop.f32.mrf.mxu0
  %v100 = vadd.f32 0.0, %v99
  %101 = vmatmul.f32.gmra.mxu0 %v62
  %v102 = vpop.f32.mrf.mxu0
  %v103 = vadd.f32 0.0, %v102
  %104 = vmatmul.f32.gmra.mxu0 %v65
  %v105 = vpop.f32.mrf.mxu0
  %v106 = vadd.f32 0.0, %v105
  %107 = vmatmul.f32.gmra.mxu0 %v68
  %v108 = vpop.f32.mrf.mxu0
  %v109 = vadd.f32 0.0, %v108
  %110 = vmatmul.f32.gmra.mxu0 %v71
  %v111 = vpop.f32.mrf.mxu0
  %v112 = vadd.f32 0.0, %v111
  %113 = vmatmul.f32.gmra.mxu0 %v74
  %v114 = vpop.f32.mrf.mxu0
  %v115 = vadd.f32 0.0, %v114
  %116 = vdwg.mxu0
  %vm117 = vcmask 130048
  %v119 = vsel %vm117, %v32, 0
  %v122 = vsel %vm117, %v33, 0
  %v125 = vsel %vm117, %v34, 0
  %v128 = vsel %vm117, %v35, 0
  %v131 = vsel %vm117, %v36, 0
  %v134 = vsel %vm117, %v37, 0
  %v137 = vsel %vm117, %v38, 0
  %v140 = vsel %vm117, %v39, 0
  %142 = vmatpush.msra.mxu0 0.0
  %143 = vmatpush.msra.mxu0 0.0
  %144 = vmatpush.msra.mxu0 0.0
  %145 = vmatpush.msra.mxu0 0.0
  %146 = vmatpush.msra.mxu0 0.0
  %147 = vmatpush.msra.mxu0 0.0
  %148 = vmatpush.msra.mxu0 0.0
  %149 = vmatpush.msra.mxu0 0.0
  %150 = vmatpush.msra.mxu0 0.0
  %151 = vmatpush.msra.mxu0 0.0
  %152 = vmatpush.msra.mxu0 0.0
  %153 = vmatpush.msra.mxu0 0.0
  %154 = vmatpush.msra.mxu0 0.0
  %155 = vmatpush.msra.mxu0 0.0
  %156 = vmatpush.msra.mxu0 %v49
  %157 = vmatpush.msra.mxu0 %v48
  %158 = vmatmul.f32.gmra.mxu0 %v119
  %v159 = vpop.f32.mrf.mxu0
  %v160 = vadd.f32 %v94, %v159
  %161 = vmatmul.f32.gmra.mxu0 %v122
  %v162 = vpop.f32.mrf.mxu0
  %v163 = vadd.f32 %v97, %v162
  %164 = vmatmul.f32.gmra.mxu0 %v125
  %v165 = vpop.f32.mrf.mxu0
  %v166 = vadd.f32 %v100, %v165
  %167 = vmatmul.f32.gmra.mxu0 %v128
  %v168 = vpop.f32.mrf.mxu0
  %v169 = vadd.f32 %v103, %v168
  %170 = vmatmul.f32.gmra.mxu0 %v131
  %v171 = vpop.f32.mrf.mxu0
  %v172 = vadd.f32 %v106, %v171
  %173 = vmatmul.f32.gmra.mxu0 %v134
  %v174 = vpop.f32.mrf.mxu0
  %v175 = vadd.f32 %v109, %v174
  %176 = vmatmul.f32.gmra.mxu0 %v137
  %v177 = vpop.f32.mrf.mxu0
  %v178 = vadd.f32 %v112, %v177
  %179 = vmatmul.f32.gmra.mxu0 %v140
  %v180 = vpop.f32.mrf.mxu0
  %v181 = vadd.f32 %v115, %v180
  %182 = vdwg.mxu0
  %v183 = vld [vmem:[%s6] sm:$0x1]
  %v185 = vperm.slane %v183, 0
  %v187 = vadd.f32 %v160, %v185
  %v188 = vadd.f32 %v163, %v185
  %v189 = vadd.f32 %v166, %v185
  %v190 = vadd.f32 %v169, %v185
  %v191 = vadd.f32 %v172, %v185
  %v192 = vadd.f32 %v175, %v185
  %v193 = vadd.f32 %v178, %v185
  %v194 = vadd.f32 %v181, %v185
  %v195 = vmax.f32 %v187, 0.0
  %v196 = vmax.f32 %v188, 0.0
  %v197 = vmax.f32 %v189, 0.0
  %v198 = vmax.f32 %v190, 0.0
  %v199 = vmax.f32 %v191, 0.0
  %v200 = vmax.f32 %v192, 0.0
  %v201 = vmax.f32 %v193, 0.0
  %v202 = vmax.f32 %v194, 0.0
  %v203 = vld [vmem:[%s4] sm:$0xff]
  %v204 = vld [vmem:[%s4 + $0x8] sm:$0xff]
  %v205 = vld [vmem:[%s4 + $0x10] sm:$0xff]
  %v206 = vld [vmem:[%s4 + $0x18] sm:$0xff]
  %v207 = vld [vmem:[%s7] sm:$0x1]
  %v209 = vperm.slane %v207, 0
  %vm211 = vcmask 261120
  %v213 = vsel %vm211, %v195, 0
  %v216 = vsel %vm211, %v196, 0
  %v219 = vsel %vm211, %v197, 0
  %v222 = vsel %vm211, %v198, 0
  %v225 = vsel %vm211, %v199, 0
  %v228 = vsel %vm211, %v200, 0
  %v231 = vsel %vm211, %v201, 0
  %v234 = vsel %vm211, %v202, 0
  %236 = vmatpush.msra.mxu0 0.0
  %237 = vmatpush.msra.mxu0 0.0
  %238 = vmatpush.msra.mxu0 0.0
  %239 = vmatpush.msra.mxu0 0.0
  %240 = vmatpush.msra.mxu0 0.0
  %241 = vmatpush.msra.mxu0 0.0
  %242 = vmatpush.msra.mxu0 0.0
  %243 = vmatpush.msra.mxu0 0.0
  %244 = vmatpush.msra.mxu0 0.0
  %245 = vmatpush.msra.mxu0 0.0
  %246 = vmatpush.msra.mxu0 0.0
  %247 = vmatpush.msra.mxu0 0.0
  %248 = vmatpush.msra.mxu0 %v206
  %249 = vmatpush.msra.mxu0 %v205
  %250 = vmatpush.msra.mxu0 %v204
  %251 = vmatpush.msra.mxu0 %v203
  %252 = vmatmul.f32.gmra.mxu0 %v213
  %v253 = vpop.f32.mrf.mxu0
  %v254 = vadd.f32 %v209, %v253
  %255 = vmatmul.f32.gmra.mxu0 %v216
  %v256 = vpop.f32.mrf.mxu0
  %v257 = vadd.f32 %v209, %v256
  %258 = vmatmul.f32.gmra.mxu0 %v219
  %v259 = vpop.f32.mrf.mxu0
  %v260 = vadd.f32 %v209, %v259
  %261 = vmatmul.f32.gmra.mxu0 %v222
  %v262 = vpop.f32.mrf.mxu0
  %v263 = vadd.f32 %v209, %v262
  %264 = vmatmul.f32.gmra.mxu0 %v225
  %v265 = vpop.f32.mrf.mxu0
  %v266 = vadd.f32 %v209, %v265
  %267 = vmatmul.f32.gmra.mxu0 %v228
  %v268 = vpop.f32.mrf.mxu0
  %v269 = vadd.f32 %v209, %v268
  %270 = vmatmul.f32.gmra.mxu0 %v231
  %v271 = vpop.f32.mrf.mxu0
  %v272 = vadd.f32 %v209, %v271
  %273 = vmatmul.f32.gmra.mxu0 %v234
  %v274 = vpop.f32.mrf.mxu0
  %v275 = vadd.f32 %v209, %v274
  %276 = vdwg.mxu0
  %v277 = vmax.f32 %v254, 0.0
  %v278 = vmax.f32 %v257, 0.0
  %v279 = vmax.f32 %v260, 0.0
  %v280 = vmax.f32 %v263, 0.0
  %v281 = vmax.f32 %v266, 0.0
  %v282 = vmax.f32 %v269, 0.0
  %v283 = vmax.f32 %v272, 0.0
  %v284 = vmax.f32 %v275, 0.0
  %v285 = vld [vmem:[%s5] sm:$0xff]
  %v286 = vld [vmem:[%s5 + $0x8] sm:$0xff]
  %v287 = vld [vmem:[%s5 + $0x10] sm:$0xff]
  %v288 = vld [vmem:[%s5 + $0x18] sm:$0xff]
  %v289 = vld [vmem:[%s8] sm:$0x1]
  %v291 = vperm.slane %v289, 0
  %v294 = vsel %vm211, %v277, 0
  %v297 = vsel %vm211, %v278, 0
  %v300 = vsel %vm211, %v279, 0
  %v303 = vsel %vm211, %v280, 0
  %v306 = vsel %vm211, %v281, 0
  %v309 = vsel %vm211, %v282, 0
  %v312 = vsel %vm211, %v283, 0
  %v315 = vsel %vm211, %v284, 0
  %317 = vmatpush.msra.mxu0 0.0
  %318 = vmatpush.msra.mxu0 0.0
  %319 = vmatpush.msra.mxu0 0.0
  %320 = vmatpush.msra.mxu0 0.0
  %321 = vmatpush.msra.mxu0 0.0
  %322 = vmatpush.msra.mxu0 0.0
  %323 = vmatpush.msra.mxu0 0.0
  %324 = vmatpush.msra.mxu0 0.0
  %325 = vmatpush.msra.mxu0 0.0
  %326 = vmatpush.msra.mxu0 0.0
  %327 = vmatpush.msra.mxu0 0.0
  %328 = vmatpush.msra.mxu0 0.0
  %329 = vmatpush.msra.mxu0 %v288
  %330 = vmatpush.msra.mxu0 %v287
  %331 = vmatpush.msra.mxu0 %v286
  %332 = vmatpush.msra.mxu0 %v285
  %333 = vmatmul.f32.gmra.mxu0 %v294
  %v334 = vpop.f32.mrf.mxu0
  %v335 = vadd.f32 %v291, %v334
  %336 = vmatmul.f32.gmra.mxu0 %v297
  %v337 = vpop.f32.mrf.mxu0
  %v338 = vadd.f32 %v291, %v337
  %339 = vmatmul.f32.gmra.mxu0 %v300
  %v340 = vpop.f32.mrf.mxu0
  %v341 = vadd.f32 %v291, %v340
  %342 = vmatmul.f32.gmra.mxu0 %v303
  %v343 = vpop.f32.mrf.mxu0
  %v344 = vadd.f32 %v291, %v343
  %345 = vmatmul.f32.gmra.mxu0 %v306
  %v346 = vpop.f32.mrf.mxu0
  %v347 = vadd.f32 %v291, %v346
  %348 = vmatmul.f32.gmra.mxu0 %v309
  %v349 = vpop.f32.mrf.mxu0
  %v350 = vadd.f32 %v291, %v349
  %351 = vmatmul.f32.gmra.mxu0 %v312
  %v352 = vpop.f32.mrf.mxu0
  %v353 = vadd.f32 %v291, %v352
  %354 = vmatmul.f32.gmra.mxu0 %v315
  %v355 = vpop.f32.mrf.mxu0
  %v356 = vadd.f32 %v291, %v355
  %357 = vdwg.mxu0
  %vm358 = vcmask 39936
  %359 = vst.msk [vmem:[%s9] sm:$0xff] %vm358, %v335
  %360 = vst.msk [vmem:[%s9 + $0x8] sm:$0xff] %vm358, %v338
  %361 = vst.msk [vmem:[%s9 + $0x10] sm:$0xff] %vm358, %v341
  %362 = vst.msk [vmem:[%s9 + $0x18] sm:$0xff] %vm358, %v344
  %363 = vst.msk [vmem:[%s9 + $0x20] sm:$0xff] %vm358, %v347
  %364 = vst.msk [vmem:[%s9 + $0x28] sm:$0xff] %vm358, %v350
  %365 = vst.msk [vmem:[%s9 + $0x30] sm:$0xff] %vm358, %v353
  %366 = vst.msk [vmem:[%s9 + $0x38] sm:$0xff] %vm358, %v356
  // Predicated region
  $region38: #{mlp_agent_forward.1} parent=0 // pred_check
    _
  $region39: #{mlp_agent_forward.1} parent=0 // pred_check_branch
    %368 = sbr.rel (0) target = $region41
  $region40: #{mlp_agent_forward.1} parent=0 // pred_region
    _
  $region41: #{mlp_agent_forward.1} parent=0 // pred_fallthru
    _
  // Predicated region
  $region42: #{mlp_agent_forward.1} parent=0 // pred_check
    _
  $region43: #{mlp_agent_forward.1} parent=0 // pred_check_branch
    %370 = sbr.rel (0) target = $region45
  $region44: #{mlp_agent_forward.1} parent=0 // pred_region
    _
  $region45: #{mlp_agent_forward.1} parent=0 // pred_fallthru
    _

</llo_original>
